<compile_context>
chip_gen: v7x
topology: tpu7x:2x2x1
jax: 0.10.0
libtpu: 0.0.40
codegen_flags: <defaults>
</compile_context>

<pallas_src>
import math
import jax
import jax.numpy as jnp
from jax import lax
from jax.experimental import pallas as pl
from jax.experimental.pallas import tpu as pltpu


def _round_up(a: int, m: int) -> int:
    return (a + m - 1) // m * m


def _pick_tile(size: int, tile_max: int, align: int):
    """Pick a tile size <= tile_max (aligned) such that the last tile is nearly full.

    Returns (tile, padded_total) with padded_total % tile == 0.
    """
    padded = _round_up(size, align)
    cap = min(_round_up(tile_max, align), padded)
    n_tiles = -(-padded // cap)                       # cdiv
    tile = _round_up(-(-padded // n_tiles), align)    # balanced, aligned
    return tile, n_tiles * tile


def laff_kernel(x_ref, w_ref, b_ref, o_ref, acc_ref, rs_ref):
    """One (tm, tn) output tile; K-reduction over grid axis 2.

    x_ref : (tm, tk)  input tile
    w_ref : (tn, tk)  weight tile in PyTorch (out, in) layout — contracted on
                      its last dim, so no W^T materialization anywhere.
    b_ref : (1, tn)   bias row (f32)
    acc_ref: (tm, tn) f32 matmul accumulator (bias folded into its init)
    rs_ref : (tm, 1)  f32 row-sum accumulator for the +sum(x, -1) term
    """
    k = pl.program_id(2)

    @pl.when(k == 0)
    def _():
        # Bias folded into the accumulator init: no epilogue bias add.
        acc_ref[...] = jnp.broadcast_to(b_ref[...], acc_ref.shape)
        rs_ref[...] = jnp.zeros_like(rs_ref)

    x = x_ref[...]

    # x @ W^T on the MXU: contract last dims of x (tm, tk) and W (tn, tk).
    acc_ref[...] += lax.dot_general(
        x, w_ref[...],
        dimension_numbers=(((1,), (1,)), ((), ())),
        preferred_element_type=jnp.float32,
    )

    # LinearlyAugmentedFF's +sum(x, dim=-1, keepdim=True) term:
    # XLU cross-lane reduce, effectively free beside the MXU matmul.
    rs_ref[...] += jnp.sum(x.astype(jnp.float32), axis=-1, keepdims=True)

    @pl.when(k == pl.num_programs(2) - 1)
    def _():
        # Identity activation -> just cast and store (lane-dense vst).
        o_ref[...] = (acc_ref[...] + rs_ref[...]).astype(o_ref.dtype)


def linearly_augmented_ff(x, weight, bias, *, tm_max=512, tn_max=1024, tk_max=512):
    """x: (B, in_f); weight: (out_f, in_f) [PyTorch layout]; bias: (out_f,)."""
    B, in_f = x.shape
    out_f, in_f_w = weight.shape
    assert in_f_w == in_f, "weight shape must be (out_features, in_features)"
    out_dtype = x.dtype

    # Keep matmul operands in a common dtype; bias stays f32 (exact, no round-trip).
    if weight.dtype != x.dtype:
        weight = weight.astype(x.dtype)
    bias2d = bias.astype(jnp.float32).reshape(1, out_f)

    # Balanced, aligned tile sizes: sublane (M) 8-aligned, lane dims (N, K) 128-aligned.
    tm, M = _pick_tile(B, tm_max, 8)
    tn, N = _pick_tile(out_f, tn_max, 128)
    tk, K = _pick_tile(in_f, tk_max, 128)

    # Zero-pad only when not already tile-aligned (zeros keep the math exact:
    # zero K-columns contribute nothing to the matmul or to the row sum).
    xp = x if (M == B and K == in_f) else jnp.pad(x, ((0, M - B), (0, K - in_f)))
    wp = weight if (N == out_f and K == in_f) else jnp.pad(
        weight, ((0, N - out_f), (0, K - in_f)))
    bp = bias2d if N == out_f else jnp.pad(bias2d, ((0, 0), (0, N - out_f)))

    grid = (M // tm, N // tn, K // tk)

    out = pl.pallas_call(
        laff_kernel,
        out_shape=jax.ShapeDtypeStruct((M, N), out_dtype),
        grid_spec=pltpu.PrefetchScalarGridSpec(
            num_scalar_prefetch=0,
            grid=grid,
            in_specs=[
                pl.BlockSpec((tm, tk), lambda i, j, k: (i, k)),   # x tile
                pl.BlockSpec((tn, tk), lambda i, j, k: (j, k)),   # W tile (out, in) layout
                pl.BlockSpec((1, tn), lambda i, j, k: (0, j)),    # f32 bias row
            ],
            out_specs=pl.BlockSpec((tm, tn), lambda i, j, k: (i, j)),
            scratch_shapes=[
                pltpu.VMEM((tm, tn), jnp.float32),  # f32 matmul accumulator
                pltpu.VMEM((tm, 1), jnp.float32),   # f32 row-sum accumulator
            ],
        ),
        compiler_params=pltpu.CompilerParams(
            dimension_semantics=("parallel", "parallel", "arbitrary"),
            # ~12.3 MiB budget at default tiles; 32 MiB scoped limit is safe on
            # v5e (128 MiB phys), v6e (128 MiB phys) and v7x (64 MiB phys).
            vmem_limit_bytes=32 << 20,
        ),
    )(xp, wp, bp)

    # Slice padding off only if any was added.
    if M == B and N == out_f:
        return out
    return out[:B, :out_f]


if __name__ == "__main__":
    # Small shapes consistent with the module: batch=16, in_features=32, out_features=64
    B, IN_F, OUT_F = 16, 32, 64

    key = jax.random.PRNGKey(0)
    kx, kw, kb = jax.random.split(key, 3)

    # Deterministic PyTorch-style Linear init: U(-1/sqrt(in), 1/sqrt(in))
    bound = 1.0 / math.sqrt(IN_F)
    weight = jax.random.uniform(kw, (OUT_F, IN_F), jnp.float32, -bound, bound)
    bias = jax.random.uniform(kb, (OUT_F,), jnp.float32, -bound, bound)

    x = jax.random.normal(kx, (B, IN_F), jnp.float32)

    out = jax.block_until_ready(linearly_augmented_ff(x, weight, bias))

    # Reference check (plain JAX): Linear(x) + sum(x, -1, keepdim) with Identity activation.
    ref = x @ weight.T + bias + jnp.sum(x, axis=-1, keepdims=True)
    assert out.shape == (B, OUT_F)
    assert jnp.allclose(out, ref, atol=1e-4, rtol=1e-4), "mismatch vs reference"

    print("KERNEL_OK")
</pallas_src>

<mosaic_0001>
module attributes {stable_mosaic.version = 11 : i64} {
  func.func @laff_kernel(%arg0: i32, %arg1: i32, %arg2: i32, %arg3: memref<16x128xf32, #tpu.memory_space<vmem>>, %arg4: memref<128x128xf32, #tpu.memory_space<vmem>>, %arg5: memref<1x128xf32, #tpu.memory_space<vmem>>, %arg6: memref<16x128xf32, #tpu.memory_space<vmem>>, %arg7: memref<16x128xf32, #tpu.memory_space<vmem>>, %arg8: memref<16x1xf32, #tpu.memory_space<vmem>>) attributes {dimension_semantics = [#tpu.dimension_semantics<parallel>, #tpu.dimension_semantics<parallel>, #tpu.dimension_semantics<arbitrary>], iteration_bounds = array<i64: 1, 1, 1>, scalar_prefetch = 0 : i64, scratch_operands = 2 : i64, tpu.core_type = #tpu.core_type<tc>, window_params = [{transform_indices = @transform_0, window_bounds = array<i64: 16, 128>}, {transform_indices = @transform_1, window_bounds = array<i64: 128, 128>}, {transform_indices = @transform_2, window_bounds = array<i64: 1, 128>}, {transform_indices = @transform_3, window_bounds = array<i64: 16, 128>}]} {
    %c0_i32 = arith.constant 0 : i32
    %0 = arith.cmpi eq, %arg2, %c0_i32 : i32
    %1 = arith.extui %0 : i1 to i32
    %c0_i32_0 = arith.constant 0 : i32
    %2 = arith.cmpi ne, %1, %c0_i32_0 : i32
    scf.if %2 {
      %c0_15 = arith.constant 0 : index
      %c0_16 = arith.constant 0 : index
      %17 = vector.load %arg5[%c0_15, %c0_16] : memref<1x128xf32, #tpu.memory_space<vmem>>, vector<1x128xf32>
      %18 = vector.shape_cast %17 : vector<1x128xf32> to vector<1x128xf32>
      %19 = vector.broadcast %18 : vector<1x128xf32> to vector<16x128xf32>
      %c0_17 = arith.constant 0 : index
      %c0_18 = arith.constant 0 : index
      %20 = vector.load %arg7[%c0_17, %c0_18] : memref<16x128xf32, #tpu.memory_space<vmem>>, vector<16x128xf32>
      tpu.vector_store %arg7[%c0_17, %c0_18], %19 {strides = array<i32>} : memref<16x128xf32, #tpu.memory_space<vmem>>, vector<16x128xf32>,
      %cst_19 = arith.constant 0.000000e+00 : f32
      %21 = vector.broadcast %cst_19 : f32 to vector<16x1xf32>
      %c0_20 = arith.constant 0 : index
      %c0_21 = arith.constant 0 : index
      %22 = vector.load %arg8[%c0_20, %c0_21] : memref<16x1xf32, #tpu.memory_space<vmem>>, vector<16x1xf32>
      tpu.vector_store %arg8[%c0_20, %c0_21], %21 {strides = array<i32>} : memref<16x1xf32, #tpu.memory_space<vmem>>, vector<16x1xf32>,
    } else {
    }
    %c0 = arith.constant 0 : index
    %c0_1 = arith.constant 0 : index
    %3 = vector.load %arg3[%c0, %c0_1] : memref<16x128xf32, #tpu.memory_space<vmem>>, vector<16x128xf32>
    %c0_2 = arith.constant 0 : index
    %c0_3 = arith.constant 0 : index
    %4 = vector.load %arg7[%c0_2, %c0_3] : memref<16x128xf32, #tpu.memory_space<vmem>>, vector<16x128xf32>
    %c0_4 = arith.constant 0 : index
    %c0_5 = arith.constant 0 : index
    %5 = vector.load %arg4[%c0_4, %c0_5] : memref<128x128xf32, #tpu.memory_space<vmem>>, vector<128x128xf32>
    %cst = arith.constant dense<0.000000e+00> : vector<16x128xf32>
    %6 = tpu.matmul %3, %5, %cst {dimension_numbers = #tpu.dot_dimension_numbers<[1], [1], [0], [0], [0, 0, 1, 0], [], []>} : vector<16x128xf32>, vector<128x128xf32>, vector<16x128xf32> -> vector<16x128xf32>
    %7 = arith.addf %4, %6 : vector<16x128xf32>
    %c0_6 = arith.constant 0 : index
    %c0_7 = arith.constant 0 : index
    %8 = vector.load %arg7[%c0_6, %c0_7] : memref<16x128xf32, #tpu.memory_space<vmem>>, vector<16x128xf32>
    tpu.vector_store %arg7[%c0_6, %c0_7], %7 {strides = array<i32>} : memref<16x128xf32, #tpu.memory_space<vmem>>, vector<16x128xf32>,
    %c0_8 = arith.constant 0 : index
    %c0_9 = arith.constant 0 : index
    %9 = vector.load %arg8[%c0_8, %c0_9] : memref<16x1xf32, #tpu.memory_space<vmem>>, vector<16x1xf32>
    %cst_10 = arith.constant dense<0.000000e+00> : vector<16xf32>
    %10 = vector.multi_reduction <add>, %3, %cst_10 [1] : vector<16x128xf32> to vector<16xf32>
    %11 = vector.shape_cast %10 : vector<16xf32> to vector<16x1xf32>
    %12 = arith.addf %9, %11 : vector<16x1xf32>
    %c0_11 = arith.constant 0 : index
    %c0_12 = arith.constant 0 : index
    %13 = vector.load %arg8[%c0_11, %c0_12] : memref<16x1xf32, #tpu.memory_space<vmem>>, vector<16x1xf32>
    tpu.vector_store %arg8[%c0_11, %c0_12], %12 {strides = array<i32>} : memref<16x1xf32, #tpu.memory_space<vmem>>, vector<16x1xf32>,
    %c0_i32_13 = arith.constant 0 : i32
    %14 = arith.cmpi eq, %arg2, %c0_i32_13 : i32
    %15 = arith.extui %14 : i1 to i32
    %c0_i32_14 = arith.constant 0 : i32
    %16 = arith.cmpi ne, %15, %c0_i32_14 : i32
    scf.if %16 {
      %c0_15 = arith.constant 0 : index
      %c0_16 = arith.constant 0 : index
      %17 = vector.load %arg7[%c0_15, %c0_16] : memref<16x128xf32, #tpu.memory_space<vmem>>, vector<16x128xf32>
      %c0_17 = arith.constant 0 : index
      %c0_18 = arith.constant 0 : index
      %18 = vector.load %arg8[%c0_17, %c0_18] : memref<16x1xf32, #tpu.memory_space<vmem>>, vector<16x1xf32>
      %19 = vector.broadcast %18 : vector<16x1xf32> to vector<16x128xf32>
      %20 = arith.addf %17, %19 : vector<16x128xf32>
      %c0_19 = arith.constant 0 : index
      %c0_20 = arith.constant 0 : index
      %21 = vector.load %arg6[%c0_19, %c0_20] : memref<16x128xf32, #tpu.memory_space<vmem>>, vector<16x128xf32>
      tpu.vector_store %arg6[%c0_19, %c0_20], %20 {strides = array<i32>} : memref<16x128xf32, #tpu.memory_space<vmem>>, vector<16x128xf32>,
    } else {
    }
    return
  }
  func.func @transform_0(%arg0: i32, %arg1: i32, %arg2: i32) -> (i32, i32) {
    %c0_i32 = arith.constant 0 : i32
    return %arg0, %arg2 : i32, i32
  }
  func.func @transform_1(%arg0: i32, %arg1: i32, %arg2: i32) -> (i32, i32) {
    %c0_i32 = arith.constant 0 : i32
    return %arg1, %arg2 : i32, i32
  }
  func.func @transform_2(%arg0: i32, %arg1: i32, %arg2: i32) -> (i32, i32) {
    %c0_i32 = arith.constant 0 : i32
    %c0_i32_0 = arith.constant 0 : i32
    return %c0_i32, %arg1 : i32, i32
  }
  func.func @transform_3(%arg0: i32, %arg1: i32, %arg2: i32) -> (i32, i32) {
    %c0_i32 = arith.constant 0 : i32
    return %arg0, %arg1 : i32, i32
  }
}

</mosaic_0001>

<llo_original>
// kernel: tpu_custom_call.1
$region0: #{tpu_custom_call.1}
  #allocation0 [shape = 'u32[]', space=smem, size = 0x4, offset = 0x4, fixed_abs, tag = 'smem constant byte address 0x4 - core index']
  #allocation1 [shape = 'u32[144,128]{1,0:T(1,128)}', space=vmem, size = 0x12000, scoped, tag = 'internal scratch']
  #allocation2 [shape = 'f32[16,128]{1,0:T(8,128)}', space=vmem, size = 0x2000, scoped, tag = 'scratch operand']
  #allocation3 [shape = 'f32[16,1]{1,0:T(8,128)}', space=vmem, size = 0x2000, scoped, tag = 'scratch operand']
  %s0 = inlined_call_operand.hbm [shape: f32[16,128], index: 0, kind: input, shape index: {}]
  %s1 = inlined_call_operand.hbm [shape: f32[128,128], index: 1, kind: input, shape index: {}]
  %s2 = inlined_call_operand.vmem [shape: f32[1,128], index: 2, kind: input, shape index: {}]
  %s3 = inlined_call_operand.hbm [shape: f32[16,128], index: 3, kind: output, shape index: {}]
  %s4 = sld [smem:[#allocation0]]
  $region38: #{tpu_custom_call.1} parent=0
    _
  %s6 = ssub.s32 1, %s4
  %s7 = scalar_select 0, %s6, %s4
  $region1: #{tpu_custom_call.1} parent=0
    #allocation4 [shape = 'u8[8192]{0}', space=vmem, size = 0x2000, scoped, tag = 'input window, operand 0, single buffered']
    #allocation5 [shape = 's32[1]{0}', space=sflag, size = 0x4, scoped, tag = 'scoped memory for tpu_custom_call.1']
    #allocation6 [shape = 's32[1]{0}', space=sflag, size = 0x4, scoped, tag = 'scoped memory for tpu_custom_call.1']
    #allocation7 [shape = 'u8[65536]{0}', space=vmem, size = 0x10000, scoped, tag = 'input window, operand 1, single buffered']
    #allocation8 [shape = 's32[1]{0}', space=sflag, size = 0x4, scoped, tag = 'scoped memory for tpu_custom_call.1']
    #allocation9 [shape = 'u8[8192]{0}', space=vmem, size = 0x2000, scoped, tag = 'output window, operand 0, single buffered']
    %8 = vsyncpa [#allocation5], 0
    %9 = vsyncpa [#allocation8], 0
    %10 = vsyncpa [#allocation6], 0
    // Predicated region
    $region2: #{tpu_custom_call.1} parent=1 // pred_check
      _
    $region3: #{tpu_custom_call.1} parent=1 // pred_check_branch
      %12 = sbr.rel (0) target = $region5
    $region4: #{tpu_custom_call.1} parent=1 // pred_region
      %s14 = ssub.s32 256, 256
      %15 = vsyncadd [#allocation5], %s14
      %s16 = sshll.u32 [#allocation4], 4
      %s17 = int_to_ptr.vmem [resolvable:$true] %s16
      %22 = dma.hbm_to_vmem [thread:$0]  %s0, 256, %s17, [#allocation5], 128, 128, 8
    $region5: #{tpu_custom_call.1} parent=1 // pred_fallthru
      _
    // Predicated region
    $region6: #{tpu_custom_call.1} parent=1 // pred_check
      _
    $region7: #{tpu_custom_call.1} parent=1 // pred_check_branch
      %24 = sbr.rel (0) target = $region9
    $region8: #{tpu_custom_call.1} parent=1 // pred_region
      %s26 = ssub.s32 2048, 2048
      %27 = vsyncadd [#allocation8], %s26
      %s28 = sshll.u32 [#allocation7], 4
      %s29 = int_to_ptr.vmem [resolvable:$true] %s28
      %34 = dma.hbm_to_vmem [thread:$0]  %s1, 2048, %s29, [#allocation8], 128, 128, 8
    $region9: #{tpu_custom_call.1} parent=1 // pred_fallthru
      _
    // Predicated region
    $region10: #{tpu_custom_call.1} parent=1 // pred_check
      _
    $region11: #{tpu_custom_call.1} parent=1 // pred_check_branch
      %36 = sbr.rel (0) target = $region13
    $region12: #{tpu_custom_call.1} parent=1 // pred_region
      _
    $region13: #{tpu_custom_call.1} parent=1 // pred_fallthru
      _
    // Predicated region
    $region14: #{tpu_custom_call.1} parent=1 // pred_check
      _
    $region15: #{tpu_custom_call.1} parent=1 // pred_check_branch
      %38 = sbr.rel (0) target = $region17
    $region16: #{tpu_custom_call.1} parent=1 // pred_region
      %39 = dma.done [#allocation5], 256
    $region17: #{tpu_custom_call.1} parent=1 // pred_fallthru
      _
    // Predicated region
    $region18: #{tpu_custom_call.1} parent=1 // pred_check
      _
    $region19: #{tpu_custom_call.1} parent=1 // pred_check_branch
      %41 = sbr.rel (0) target = $region21
    $region20: #{tpu_custom_call.1} parent=1 // pred_region
      %42 = dma.done [#allocation8], 2048
    $region21: #{tpu_custom_call.1} parent=1 // pred_fallthru
      _
    %p43 = scmp.eq.s32.totalorder 0, 0
    // Predicated region
    $region22: #{tpu_custom_call.1} parent=1 // pred_check
      %p44 = pneg %p43
    $region23: #{tpu_custom_call.1} parent=1 // pred_check_branch
      %46 = sbr.rel (%p44) target = $region25
    $region24: #{tpu_custom_call.1} parent=1 // pred_region
      %v47 = vld [vmem:[%s2] sm:$0x1]
      %v49 = vlaneseq
      %v50 = vshrl.u32 %v49, 7
      %v51 = vsub.s32 0, %v50
      %v52 = vrot.slane %v47, %v51
      %54 = vst [vmem:[#allocation2] sm:$0xff] %v52
      %55 = vst [vmem:[#allocation2 + $0x8] sm:$0xff] %v52
      %vm56 = vcmask 7168
      %57 = vst.msk [vmem:[#allocation3] sm:$0xff] %vm56, 0.0
      %58 = vst.msk [vmem:[#allocation3 + $0x8] sm:$0xff] %vm56, 0.0
    $region25: #{tpu_custom_call.1} parent=1 // pred_fallthru
      _
    %v59 = vld [vmem:[#allocation4] sm:$0xff]
    %v60 = vld [vmem:[#allocation4 + $0x8] sm:$0xff]
    %v61 = vld [vmem:[#allocation2] sm:$0xff]
    %v62 = vld [vmem:[#allocation2 + $0x8] sm:$0xff]
    %v63 = vld [vmem:[#allocation7] sm:$0xff]
    %v64 = vld [vmem:[#allocation7 + $0x8] sm:$0xff]
    %v65 = vld [vmem:[#allocation7 + $0x10] sm:$0xff]
    %v66 = vld [vmem:[#allocation7 + $0x18] sm:$0xff]
    %v67 = vld [vmem:[#allocation7 + $0x20] sm:$0xff]
    %v68 = vld [vmem:[#allocation7 + $0x28] sm:$0xff]
    %v69 = vld [vmem:[#allocation7 + $0x30] sm:$0xff]
    %v70 = vld [vmem:[#allocation7 + $0x38] sm:$0xff]
    %v71 = vld [vmem:[#allocation7 + $0x40] sm:$0xff]
    %v72 = vld [vmem:[#allocation7 + $0x48] sm:$0xff]
    %v73 = vld [vmem:[#allocation7 + $0x50] sm:$0xff]
    %v74 = vld [vmem:[#allocation7 + $0x58] sm:$0xff]
    %v75 = vld [vmem:[#allocation7 + $0x60] sm:$0xff]
    %v76 = vld [vmem:[#allocation7 + $0x68] sm:$0xff]
    %v77 = vld [vmem:[#allocation7 + $0x70] sm:$0xff]
    %v78 = vld [vmem:[#allocation7 + $0x78] sm:$0xff]
    %79 = vmatprep.subr.mxu0 0.0
    %80 = vmatpush1.xpose.msra.mxu0 %v63
    %81 = vmatprep.subr.mxu0 0.0
    %82 = vmatpush1.xpose.msra.mxu0 %v64
    %83 = vmatprep.subr.mxu0 0.0
    %84 = vmatpush1.xpose.msra.mxu0 %v65
    %85 = vmatprep.subr.mxu0 0.0
    %86 = vmatpush1.xpose.msra.mxu0 %v66
    %87 = vmatprep.subr.mxu0 0.0
    %88 = vmatpush1.xpose.msra.mxu0 %v67
    %89 = vmatprep.subr.mxu0 0.0
    %90 = vmatpush1.xpose.msra.mxu0 %v68
    %91 = vmatprep.subr.mxu0 0.0
    %92 = vmatpush1.xpose.msra.mxu0 %v69
    %93 = vmatprep.subr.mxu0 0.0
    %94 = vmatpush1.xpose.msra.mxu0 %v70
    %95 = vmatprep.subr.mxu0 0.0
    %96 = vmatpush1.xpose.msra.mxu0 %v71
    %97 = vmatprep.subr.mxu0 0.0
    %98 = vmatpush1.xpose.msra.mxu0 %v72
    %99 = vmatprep.subr.mxu0 0.0
    %100 = vmatpush1.xpose.msra.mxu0 %v73
    %101 = vmatprep.subr.mxu0 0.0
    %102 = vmatpush1.xpose.msra.mxu0 %v74
    %103 = vmatprep.subr.mxu0 0.0
    %104 = vmatpush1.xpose.msra.mxu0 %v75
    %105 = vmatprep.subr.mxu0 0.0
    %106 = vmatpush1.xpose.msra.mxu0 %v76
    %107 = vmatprep.subr.mxu0 0.0
    %108 = vmatpush1.xpose.msra.mxu0 %v77
    %109 = vmatprep.subr.mxu0 0.0
    %110 = vmatpush1.xpose.msra.mxu0 %v78
    %111 = vmatprep.subr.mxu0 0.0
    %112 = vmatpush1.xpose.msra.mxu0 0.0
    %113 = vmatprep.subr.mxu0 0.0
    %114 = vmatpush1.xpose.msra.mxu0 0.0
    %115 = vmatprep.subr.mxu0 0.0
    %116 = vmatpush1.xpose.msra.mxu0 0.0
    %117 = vmatprep.subr.mxu0 0.0
    %118 = vmatpush1.xpose.msra.mxu0 0.0
    %119 = vmatprep.subr.mxu0 0.0
    %120 = vmatpush1.xpose.msra.mxu0 0.0
    %121 = vmatprep.subr.mxu0 0.0
    %122 = vmatpush1.xpose.msra.mxu0 0.0
    %123 = vmatprep.subr.mxu0 0.0
    %124 = vmatpush1.xpose.msra.mxu0 0.0
    %125 = vmatprep.subr.mxu0 0.0
    %126 = vmatpush1.xpose.msra.mxu0 0.0
    %127 = vmatprep.subr.mxu0 0.0
    %128 = vmatpush1.xpose.msra.mxu0 0.0
    %129 = vmatprep.subr.mxu0 0.0
    %130 = vmatpush1.xpose.msra.mxu0 0.0
    %131 = vmatprep.subr.mxu0 0.0
    %132 = vmatpush1.xpose.msra.mxu0 0.0
    %133 = vmatprep.subr.mxu0 0.0
    %134 = vmatpush1.xpose.msra.mxu0 0.0
    %135 = vmatprep.subr.mxu0 0.0
    %136 = vmatpush1.xpose.msra.mxu0 0.0
    %137 = vmatprep.subr.mxu0 0.0
    %138 = vmatpush1.xpose.msra.mxu0 0.0
    %139 = vmatprep.subr.mxu0 0.0
    %140 = vmatpush1.xpose.msra.mxu0 0.0
    %141 = vmatprep.subr.mxu0 0.0
    %142 = vmatpush1.xpose.msra.mxu0 0.0
    %143 = vmatprep.mubr.f32.mxu0 0.0
    %144 = vmatmul.mubr.f32.gmra.mrb[0].mxu0 %v59
    %v145 = vpop.f32.mrb[0].mxu0
    %v146 = vadd.f32 0.0, %v145
    %v147 = vpop.f32.mrb[0].mxu0
    %148 = vmatprep.mubr.f32.mxu0 0.0
    %149 = vmatmul.mubr.f32.gmra.mrb[0].mxu0 %v60
    %v150 = vpop.f32.mrb[0].mxu0
    %v151 = vadd.f32 0.0, %v150
    %v152 = vpop.f32.mrb[0].mxu0
    %153 = vdwg.mxu0
    %v154 = vadd.f32 %v61, %v146
    %v155 = vadd.f32 %v62, %v151
    %156 = vst [vmem:[#allocation2] sm:$0xff] %v154
    %157 = vst [vmem:[#allocation2 + $0x8] sm:$0xff] %v155
    %v158 = vld [vmem:[#allocation3] sm:$0xff]
    %v159 = vld [vmem:[#allocation3 + $0x8] sm:$0xff]
    %160 = vadd.xlane.f32.xlu0 %v59
    %v161 = vpop.xlane.xlu0 %160
    %162 = vadd.xlane.f32.xlu0 %v60
    %v163 = vpop.xlane.xlu0 %162
    %v164 = vadd.f32 %v158, %v161
    %v165 = vadd.f32 %v159, %v163
    %vm166 = vcmask 7168
    %167 = vst.msk [vmem:[#allocation3] sm:$0xff] %vm166, %v164
    %168 = vst.msk [vmem:[#allocation3 + $0x8] sm:$0xff] %vm166, %v165
    // Predicated region
    $region26: #{tpu_custom_call.1} parent=1 // pred_check
      %p169 = pneg %p43
    $region27: #{tpu_custom_call.1} parent=1 // pred_check_branch
      %171 = sbr.rel (%p169) target = $region29
    $region28: #{tpu_custom_call.1} parent=1 // pred_region
      %v172 = vld [vmem:[#allocation2] sm:$0xff]
      %v173 = vld [vmem:[#allocation2 + $0x8] sm:$0xff]
      %v174 = vld [vmem:[#allocation3] sm:$0xff]
      %v175 = vld [vmem:[#allocation3 + $0x8] sm:$0xff]
      %177 = vset.pattern.permute.xlu0 0
      %178 = vperm.xlu0 %177, %v174
      %v179 = vpop.permute.xlu0 %178
      %182 = vset.pattern.permute.xlu0 0
      %183 = vperm.xlu0 %182, %v175
      %v184 = vpop.permute.xlu0 %183
      %v186 = vadd.f32 %v172, %v179
      %v187 = vadd.f32 %v173, %v184
      %188 = vst [vmem:[#allocation9] sm:$0xff] %v186
      %189 = vst [vmem:[#allocation9 + $0x8] sm:$0xff] %v187
    $region29: #{tpu_custom_call.1} parent=1 // pred_fallthru
      _
    // Predicated region
    $region30: #{tpu_custom_call.1} parent=1 // pred_check
      _
    $region31: #{tpu_custom_call.1} parent=1 // pred_check_branch
      %191 = sbr.rel (0) target = $region33
    $region32: #{tpu_custom_call.1} parent=1 // pred_region
      %s193 = ssub.s32 256, 256
      %194 = vsyncadd [#allocation6], %s193
      %s195 = sshll.u32 [#allocation9], 4
      %s196 = int_to_ptr.vmem [resolvable:$true] %s195
      %201 = dma.vmem_to_hbm [thread:$0]  %s196, 256, %s3, [#allocation6], 128, 128, 8
    $region33: #{tpu_custom_call.1} parent=1 // pred_fallthru
      _
    // Predicated region
    $region34: #{tpu_custom_call.1} parent=1 // pred_check
      _
    $region35: #{tpu_custom_call.1} parent=1 // pred_check_branch
      %203 = sbr.rel (0) target = $region37
    $region36: #{tpu_custom_call.1} parent=1 // pred_region
      %204 = dma.done [#allocation6], 256
    $region37: #{tpu_custom_call.1} parent=1 // pred_fallthru
      _
    %205 = vsyncpa [#allocation5], 1
    %206 = vsyncpa [#allocation8], 1
    %207 = vsyncpa [#allocation6], 1

</llo_original>
